<compile_context>
chip_gen: v7x
topology: tpu7x:2x2x1
jax: 0.10.0
libtpu: 0.0.40
codegen_flags: <defaults>
</compile_context>

<pallas_src>
from functools import partial, lru_cache

import jax
import jax.numpy as jnp
from jax import lax
from jax.experimental import pallas as pl
from jax.experimental.pallas import tpu as pltpu

LANE = 128


def _round_up(x, m):
    return ((x + m - 1) // m) * m


def _pick_tile(dim, cap, mult=128):
    """Largest multiple of `mult` dividing `dim`, <= cap (dim is a mult-multiple)."""
    best = min(dim, mult)
    t = mult
    while t <= min(dim, cap):
        if dim % t == 0:
            best = t
        t += mult
    return best


def _vmem_capacity_bytes():
    try:
        return int(pltpu.get_tpu_info().vmem_capacity_bytes)
    except Exception:
        return 128 * 1024 * 1024


_VMEM_CAP = _vmem_capacity_bytes()
# v7x heuristic: 64 MiB VMEM per TensorCore, 2 TCs per chip.
_TWO_CORE = _VMEM_CAP <= 96 * 1024 * 1024


# ----------------------------------------------------------------------------
# Fused matmul kernel:  out = act(X @ W [+ residual]) with bias in the acc init
# ----------------------------------------------------------------------------
@lru_cache(maxsize=None)
def _make_mm_kernel(act: str, has_res: bool):
    def kernel(x_ref, w_ref, b_ref, *rest):
        if has_res:
            r_ref, o_ref, acc_ref = rest
        else:
            o_ref, acc_ref = rest

        # bias folded into the first-K-step accumulator init
        @pl.when(pl.program_id(2) == 0)
        def _():
            acc_ref[...] = jnp.broadcast_to(b_ref[...], acc_ref.shape)

        acc_ref[...] += jnp.dot(x_ref[...], w_ref[...],
                                preferred_element_type=jnp.float32)

        @pl.when(pl.program_id(2) == pl.num_programs(2) - 1)
        def _():
            y = acc_ref[...]
            if has_res:
                y = y + r_ref[...].astype(jnp.float32)
            if act == "relu":
                y = jnp.maximum(y, 0.0)
            elif act == "sigmoid":
                y = 1.0 / (1.0 + jnp.exp(-y))
            o_ref[...] = y.astype(o_ref.dtype)

    return kernel


def matmul_fused(x, w, bias2d, act="none", residual=None, out_dtype=jnp.bfloat16):
    """x: (M, K) (K <= Kp); w: (Kp, Np) bf16 pre-padded; bias2d: (1, Np) f32.
    Returns (M, Np) in out_dtype -- padded output channels carried through."""
    M, K = x.shape
    Kp, Np = w.shape
    has_res = residual is not None

    Mp = _round_up(M, 16)
    x = x.astype(jnp.bfloat16)
    if Mp != M or Kp != K:                       # only the stem / tiny-M layers
        x = jnp.pad(x, ((0, Mp - M), (0, Kp - K)))
    if has_res:
        residual = residual.astype(jnp.bfloat16)
        if Mp != M:
            residual = jnp.pad(residual, ((0, Mp - M), (0, 0)))

    # --- tile selection -------------------------------------------------------
    tm_cap = 512 if Mp >= 2048 else 256
    tm = _pick_tile(Mp, tm_cap, 16)
    tk = _pick_tile(Kp, 2048)
    tn = _pick_tile(Np, 1024)
    # v7x: make sure both TensorCores get work on single-block grids by splitting
    # along N (weight traffic is NOT duplicated, unlike an M split).
    if _TWO_CORE and Np >= 256 and (Mp // tm) * (Np // tn) < 2:
        tn = _pick_tile(Np, max(128, Np // 2))

    # deeper weight buffering on GEMV-shaped (weight-streaming) layers
    gemv_like = tm <= 64
    n_wblocks = (Kp // tk) * (Np // tn)
    wbuf = 3 if (gemv_like and n_wblocks >= 3) else 2
    w_index = lambda i, j, k: (k, j)
    if wbuf == 3:
        try:
            w_spec = pl.BlockSpec((tk, tn), w_index, pipeline_mode=pl.Buffered(3))
        except Exception:                        # pipeline_mode unsupported
            w_spec, wbuf = pl.BlockSpec((tk, tn), w_index), 2
    else:
        w_spec = pl.BlockSpec((tk, tn), w_index)

    in_specs = [pl.BlockSpec((tm, tk), lambda i, j, k: (i, k)),
                w_spec,
                pl.BlockSpec((1, tn), lambda i, j, k: (0, j))]
    args = [x, w, bias2d]
    if has_res:
        in_specs.append(pl.BlockSpec((tm, tn), lambda i, j, k: (i, j)))
        args.append(residual)

    # --- VMEM budget: ~2x actual tile footprint, capped under physical VMEM ----
    out_b = jnp.dtype(out_dtype).itemsize
    need = (2 * tm * tk * 2            # x, double-buffered bf16
            + wbuf * tk * tn * 2       # w
            + 2 * tm * tn * out_b      # out
            + tm * tn * 4              # f32 accumulator scratch
            + 2 * tn * 4)              # bias
    if has_res:
        need += 2 * tm * tn * 2
    cap = (44 if _TWO_CORE else 100) * 1024 * 1024
    vmem_limit = int(min(max(2 * need, 16 * 1024 * 1024), cap))

    out = pl.pallas_call(
        _make_mm_kernel(act, has_res),
        out_shape=jax.ShapeDtypeStruct((Mp, Np), out_dtype),
        grid_spec=pltpu.PrefetchScalarGridSpec(
            num_scalar_prefetch=0,
            grid=(Mp // tm, Np // tn, Kp // tk),
            in_specs=in_specs,
            out_specs=pl.BlockSpec((tm, tn), lambda i, j, k: (i, j)),
            scratch_shapes=[pltpu.VMEM((tm, tn), jnp.float32)],
        ),
        compiler_params=pltpu.CompilerParams(
            dimension_semantics=("parallel", "parallel", "arbitrary"),
            vmem_limit_bytes=vmem_limit),
    )(*args)
    return out[:M] if Mp != M else out


# ----------------------------------------------------------------------------
# MaxPool2d(kernel=3, stride=2, padding=1) -- 9-way elementwise max (XLA fuses)
# ----------------------------------------------------------------------------
@jax.jit
def maxpool_3x3_s2_p1(x):  # x: NHWC
    N, H, W, C = x.shape
    oh = (H + 2 - 3) // 2 + 1
    ow = (W + 2 - 3) // 2 + 1
    xp = jnp.pad(x, ((0, 0), (1, 1), (1, 1), (0, 0)), constant_values=-jnp.inf)
    out = None
    for i in range(3):
        for j in range(3):
            s = xp[:, i:i + (oh - 1) * 2 + 1:2, j:j + (ow - 1) * 2 + 1:2, :]
            out = s if out is None else jnp.maximum(out, s)
    return out


# ----------------------------------------------------------------------------
# Conv / ConvTranspose wrappers (per-layer jitted; compute in Pallas)
# ----------------------------------------------------------------------------
@partial(jax.jit, static_argnames=("k", "stride", "pad", "act", "cout_p", "out_dtype"))
def _conv2d_impl(x, w, b, residual, *, k, stride, pad, act, cout_p, out_dtype):
    N, H, W, C = x.shape
    if k == 1:
        xs = x[:, ::stride, ::stride, :] if stride > 1 else x
        oh, ow = xs.shape[1], xs.shape[2]
        patches = xs
    else:
        xp = jnp.pad(x, ((0, 0), (pad, pad), (pad, pad), (0, 0))) if pad else x
        Hp, Wp = H + 2 * pad, W + 2 * pad
        oh = (Hp - k) // stride + 1
        ow = (Wp - k) // stride + 1
        # TODO(synk): im2col still materialized in XLA (k*k patch buffer) rather
        # than streamed with shifted index_maps / manual DMA.
        cols = []
        for i in range(k):
            for j in range(k):
                cols.append(xp[:, i:i + (oh - 1) * stride + 1:stride,
                                j:j + (ow - 1) * stride + 1:stride, :])
        patches = jnp.concatenate(cols, axis=-1)
    M = N * oh * ow
    xm = patches.reshape(M, k * k * C)
    rm = residual.reshape(M, -1) if residual is not None else None
    out = matmul_fused(xm, w, b, act=act, residual=rm, out_dtype=out_dtype)
    return out.reshape(N, oh, ow, cout_p)


def conv2d(x, p, stride, pad, act, residual=None, out_dtype=jnp.bfloat16):
    return _conv2d_impl(x, p["w"], p["b"], residual, k=p["k"], stride=stride,
                        pad=pad, act=act, cout_p=p["cout_p"], out_dtype=out_dtype)


@partial(jax.jit, static_argnames=("cout_p",))
def _tconv_impl(x, w, b, *, cout_p):
    """ConvTranspose2d(kernel=2, stride=2): matmul -> depth-to-space."""
    N, H, W, C = x.shape
    out = matmul_fused(x.reshape(N * H * W, C), w, b, act="none")
    out = out.reshape(N, H, W, 2, 2, cout_p)
    out = out.transpose(0, 1, 3, 2, 4, 5).reshape(N, 2 * H, 2 * W, cout_p)
    return out


def conv_transpose2x2(x, p):
    return _tconv_impl(x, p["w"], p["b"], cout_p=p["cout_p"])


@jax.jit
def skip_concat(skip, up):
    """Mirrors F.pad(dec, (0, dW, 0, dH)) followed by torch.cat on channels."""
    dH = skip.shape[1] - up.shape[1]
    dW = skip.shape[2] - up.shape[2]
    if dH or dW:
        up = jnp.pad(up, ((0, 0), (0, dH), (0, dW), (0, 0)))
    return jnp.concatenate([skip, up], axis=-1)


@partial(jax.jit, static_argnames=("out_channels",))
def finalize(out, *, out_channels):
    out = out[..., :out_channels]
    out = jnp.pad(out, ((0, 0),
                        (0, 133 - out.shape[1]),
                        (0, 135 - out.shape[2]),
                        (0, 0)))
    return jnp.transpose(out, (0, 3, 1, 2))  # back to NCHW


# ----------------------------------------------------------------------------
# Parameter construction: synthetic, deterministic; BN folded; weights laid out
# for 128-padded channel groups so activations never need K-padding/slicing.
# ----------------------------------------------------------------------------
def _layout_conv_weight(w_real, cin_groups, k, cout):
    """w_real: (k*k*sum(creal), cout), rows ordered (tap, group, channel).
    Returns (Kp, Np) f32 with zero rows/cols at padded-channel positions."""
    creal_tot = sum(r for r, _ in cin_groups)
    cpad_tot = sum(p for _, p in cin_groups)
    Np = _round_up(cout, LANE)
    w = w_real.reshape(k * k, creal_tot, cout)
    parts, off = [], 0
    for creal, cpad in cin_groups:
        g = w[:, off:off + creal, :]
        parts.append(jnp.pad(g, ((0, 0), (0, cpad - creal), (0, 0))))
        off += creal
    w = jnp.concatenate(parts, axis=1) if len(parts) > 1 else parts[0]
    w = w.reshape(k * k * cpad_tot, cout)
    Kp = _round_up(w.shape[0], LANE)
    return jnp.pad(w, ((0, Kp - w.shape[0]), (0, Np - cout)))


def conv_bn_params(key, cin_groups, cout, k):
    kw, kg, kb, km = jax.random.split(key, 4)
    fan_in = k * k * sum(r for r, _ in cin_groups)
    w = jax.random.normal(kw, (fan_in, cout), jnp.float32) * (2.0 / fan_in) ** 0.5
    gamma = 1.0 + 0.1 * jax.random.normal(kg, (cout,), jnp.float32)
    beta = 0.1 * jax.random.normal(kb, (cout,), jnp.float32)
    mean = 0.1 * jax.random.normal(km, (cout,), jnp.float32)
    var = jnp.ones((cout,), jnp.float32)
    scale = gamma * lax.rsqrt(var + 1e-5)
    wp = _layout_conv_weight(w * scale[None, :], cin_groups, k, cout)
    Np = wp.shape[1]
    bias = jnp.pad(beta - mean * scale, (0, Np - cout)).reshape(1, Np)
    return {"w": wp.astype(jnp.bfloat16), "b": bias.astype(jnp.float32),
            "k": k, "cout": cout, "cout_p": Np}


def conv_bias_params(key, cin_groups, cout, k):
    kw, kb = jax.random.split(key)
    fan_in = k * k * sum(r for r, _ in cin_groups)
    w = jax.random.normal(kw, (fan_in, cout), jnp.float32) * (2.0 / fan_in) ** 0.5
    b = 0.01 * jax.random.normal(kb, (cout,), jnp.float32)
    wp = _layout_conv_weight(w, cin_groups, k, cout)
    Np = wp.shape[1]
    bias = jnp.pad(b, (0, Np - cout)).reshape(1, Np)
    return {"w": wp.astype(jnp.bfloat16), "b": bias.astype(jnp.float32),
            "k": k, "cout": cout, "cout_p": Np}


def tconv_params(key, cin, cout):
    kw, kb = jax.random.split(key)
    cpad = _round_up(cout, LANE)
    cin_p = _round_up(cin, LANE)
    w = jax.random.normal(kw, (cin, 4 * cout), jnp.float32) * (2.0 / cin) ** 0.5
    b = 0.01 * jax.random.normal(kb, (cout,), jnp.float32)
    w = w.reshape(cin, 4, cout)
    w = jnp.pad(w, ((0, cin_p - cin), (0, 0), (0, cpad - cout)))
    wp = w.reshape(cin_p, 4 * cpad).astype(jnp.bfloat16)
    bias = jnp.tile(jnp.pad(b, (0, cpad - cout)), 4).reshape(1, 4 * cpad)
    return {"w": wp, "b": bias.astype(jnp.float32), "cout": cout, "cout_p": cpad}


def bottleneck_params(key, in_groups, width, stride, downsample):
    k1, k2, k3, k4 = jax.random.split(key, 4)
    wgroup = [(width, _round_up(width, LANE))]
    p = {"conv2": conv_bn_params(k2, wgroup, width, 3),
         "conv3": conv_bn_params(k3, wgroup, width * 4, 1),
         "stride": stride, "conv1": None, "down": None, "fused": None}
    conv1 = conv_bn_params(k1, in_groups, width, 1)
    if downsample:
        down = conv_bn_params(k4, in_groups, width * 4, 1)
        if stride == 1:
            # conv1 and downsample read the same rows -> one fused matmul
            p["fused"] = {"w": jnp.concatenate([conv1["w"], down["w"]], axis=1),
                          "b": jnp.concatenate([conv1["b"], down["b"]], axis=1),
                          "k": 1,
                          "cout_p": conv1["cout_p"] + down["cout_p"],
                          "split": conv1["cout_p"]}
        else:
            p["conv1"], p["down"] = conv1, down
    else:
        p["conv1"] = conv1
    return p


def make_layer_params(key, in_groups, width, blocks, stride):
    keys = jax.random.split(key, blocks)
    params = [bottleneck_params(keys[0], in_groups, width, stride, True)]
    mid = [(width * 4, _round_up(width * 4, LANE))]
    for b in range(1, blocks):
        params.append(bottleneck_params(keys[b], mid, width, 1, False))
    return params


def init_params(key, out_channels):
    ks = jax.random.split(key, 16)
    return {
        "conv1": conv_bn_params(ks[0], [(3, 3)], 64, 7),
        "layer1": make_layer_params(ks[1], [(64, 128)], 64, 3, 1),
        "layer2": make_layer_params(ks[2], [(256, 256)], 128, 4, 2),
        "layer3": make_layer_params(ks[3], [(512, 512)], 256, 6, 2),
        "layer4": make_layer_params(ks[4], [(1024, 1024)], 512, 3, 2),
        "dec5_t": tconv_params(ks[5], 2048, 1024),
        "dec4_c": conv_bias_params(ks[6], [(1024, 1024), (1024, 1024)], 1024, 3),
        "dec4_t": tconv_params(ks[7], 1024, 512),
        "dec3_c": conv_bias_params(ks[8], [(512, 512), (512, 512)], 512, 3),
        "dec3_t": tconv_params(ks[9], 512, 256),
        "dec2_c": conv_bias_params(ks[10], [(256, 256), (256, 256)], 256, 3),
        "dec2_t": tconv_params(ks[11], 256, 128),
        "dec1_c": conv_bias_params(ks[12], [(64, 128), (128, 128)], 128, 3),
        "dec1_t": tconv_params(ks[13], 128, 64),
        "cls": conv_bias_params(ks[14], [(64, 128)], out_channels, 1),
    }


# ----------------------------------------------------------------------------
# Forward pass (mirrors ResNetUNet.forward)
# ----------------------------------------------------------------------------
def run_bottleneck(x, p):
    s = p["stride"]
    if p["fused"] is not None:
        both = conv2d(x, p["fused"], stride=1, pad=0, act="none")
        split = p["fused"]["split"]
        out = jnp.maximum(both[..., :split], 0)      # relu of the conv1 half
        identity = both[..., split:]                  # downsample half (no act)
    else:
        if p["down"] is not None:
            identity = conv2d(x, p["down"], stride=s, pad=0, act="none")
        else:
            identity = x
        out = conv2d(x, p["conv1"], stride=1, pad=0, act="relu")
    out = conv2d(out, p["conv2"], stride=s, pad=1, act="relu")
    # bn3 + residual add + relu fused into the final matmul epilogue
    out = conv2d(out, p["conv3"], stride=1, pad=0, act="relu", residual=identity)
    return out


def resnet_unet_forward(params, x_nchw):
    x = jnp.transpose(x_nchw, (0, 2, 3, 1)).astype(jnp.bfloat16)  # -> NHWC bf16

    enc1 = conv2d(x, params["conv1"], stride=2, pad=3, act="relu")
    e = maxpool_3x3_s2_p1(enc1)
    for bp in params["layer1"]:
        e = run_bottleneck(e, bp)
    enc2 = e
    for bp in params["layer2"]:
        e = run_bottleneck(e, bp)
    enc3 = e
    for bp in params["layer3"]:
        e = run_bottleneck(e, bp)
    enc4 = e
    for bp in params["layer4"]:
        e = run_bottleneck(e, bp)
    enc5 = e

    dec5 = conv_transpose2x2(enc5, params["dec5_t"])
    d = conv2d(skip_concat(enc4, dec5), params["dec4_c"], stride=1, pad=1, act="relu")
    dec4 = conv_transpose2x2(d, params["dec4_t"])
    d = conv2d(skip_concat(enc3, dec4), params["dec3_c"], stride=1, pad=1, act="relu")
    dec3 = conv_transpose2x2(d, params["dec3_t"])
    d = conv2d(skip_concat(enc2, dec3), params["dec2_c"], stride=1, pad=1, act="relu")
    dec2 = conv_transpose2x2(d, params["dec2_t"])
    d = conv2d(skip_concat(enc1, dec2), params["dec1_c"], stride=1, pad=1, act="relu")
    dec1 = conv_transpose2x2(d, params["dec1_t"])

    out = conv2d(dec1, params["cls"], stride=1, pad=0, act="sigmoid",
                 out_dtype=jnp.float32)
    return finalize(out, out_channels=params["cls"]["cout"])


# ----------------------------------------------------------------------------
if __name__ == "__main__":
    key = jax.random.PRNGKey(0)
    pkey, xkey = jax.random.split(key)

    out_channels = 2
    params = init_params(pkey, out_channels)

    # small input consistent with the module (must survive 5 stride-2 stages)
    x = jax.random.normal(xkey, (1, 3, 64, 64), jnp.float32)

    out = resnet_unet_forward(params, x)
    out = jax.block_until_ready(out)

    assert out.shape == (1, out_channels, 133, 135), out.shape
    assert bool(jnp.all(jnp.isfinite(out)))
    assert bool(jnp.all(out >= 0.0)) and bool(jnp.all(out <= 1.0))
    print("KERNEL_OK")
</pallas_src>

<mosaic_0001>
module attributes {stable_mosaic.version = 11 : i64} {
  func.func @kernel(%arg0: i32, %arg1: i32, %arg2: i32, %arg3: memref<256x256xbf16, #tpu.memory_space<vmem>>, %arg4: memref<256x128xbf16, #tpu.memory_space<vmem>>, %arg5: memref<1x128xf32, #tpu.memory_space<vmem>>, %arg6: memref<256x128xbf16, #tpu.memory_space<vmem>>, %arg7: memref<256x128xf32, #tpu.memory_space<vmem>>) attributes {dimension_semantics = [#tpu.dimension_semantics<parallel>, #tpu.dimension_semantics<parallel>, #tpu.dimension_semantics<arbitrary>], iteration_bounds = array<i64: 4, 1, 1>, scalar_prefetch = 0 : i64, scratch_operands = 1 : i64, tpu.core_type = #tpu.core_type<tc>, window_params = [{transform_indices = @transform_0, window_bounds = array<i64: 256, 256>}, {transform_indices = @transform_1, window_bounds = array<i64: 256, 128>}, {transform_indices = @transform_2, window_bounds = array<i64: 1, 128>}, {transform_indices = @transform_3, window_bounds = array<i64: 256, 128>}]} {
    %c0_i32 = arith.constant 0 : i32
    %0 = arith.cmpi eq, %arg2, %c0_i32 : i32
    %1 = arith.extui %0 : i1 to i32
    %c0_i32_0 = arith.constant 0 : i32
    %2 = arith.cmpi ne, %1, %c0_i32_0 : i32
    scf.if %2 {
      %c0_10 = arith.constant 0 : index
      %c0_11 = arith.constant 0 : index
      %12 = vector.load %arg5[%c0_10, %c0_11] : memref<1x128xf32, #tpu.memory_space<vmem>>, vector<1x128xf32>
      %13 = vector.shape_cast %12 : vector<1x128xf32> to vector<1x128xf32>
      %14 = vector.broadcast %13 : vector<1x128xf32> to vector<256x128xf32>
      %c0_12 = arith.constant 0 : index
      %c0_13 = arith.constant 0 : index
      %15 = vector.load %arg7[%c0_12, %c0_13] : memref<256x128xf32, #tpu.memory_space<vmem>>, vector<256x128xf32>
      tpu.vector_store %arg7[%c0_12, %c0_13], %14 {strides = array<i32>} : memref<256x128xf32, #tpu.memory_space<vmem>>, vector<256x128xf32>,
    } else {
    }
    %c0 = arith.constant 0 : index
    %c0_1 = arith.constant 0 : index
    %3 = vector.load %arg7[%c0, %c0_1] : memref<256x128xf32, #tpu.memory_space<vmem>>, vector<256x128xf32>
    %c0_2 = arith.constant 0 : index
    %c0_3 = arith.constant 0 : index
    %4 = vector.load %arg3[%c0_2, %c0_3] : memref<256x256xbf16, #tpu.memory_space<vmem>>, vector<256x256xbf16>
    %c0_4 = arith.constant 0 : index
    %c0_5 = arith.constant 0 : index
    %5 = vector.load %arg4[%c0_4, %c0_5] : memref<256x128xbf16, #tpu.memory_space<vmem>>, vector<256x128xbf16>
    %cst = arith.constant dense<0.000000e+00> : vector<256x128xf32>
    %6 = tpu.matmul %4, %5, %cst {dimension_numbers = #tpu.dot_dimension_numbers<[1], [0], [0], [1], [0, 0, 1, 1], [], []>} : vector<256x256xbf16>, vector<256x128xbf16>, vector<256x128xf32> -> vector<256x128xf32>
    %7 = arith.addf %3, %6 : vector<256x128xf32>
    %c0_6 = arith.constant 0 : index
    %c0_7 = arith.constant 0 : index
    %8 = vector.load %arg7[%c0_6, %c0_7] : memref<256x128xf32, #tpu.memory_space<vmem>>, vector<256x128xf32>
    tpu.vector_store %arg7[%c0_6, %c0_7], %7 {strides = array<i32>} : memref<256x128xf32, #tpu.memory_space<vmem>>, vector<256x128xf32>,
    %c0_i32_8 = arith.constant 0 : i32
    %9 = arith.cmpi eq, %arg2, %c0_i32_8 : i32
    %10 = arith.extui %9 : i1 to i32
    %c0_i32_9 = arith.constant 0 : i32
    %11 = arith.cmpi ne, %10, %c0_i32_9 : i32
    scf.if %11 {
      %c0_10 = arith.constant 0 : index
      %c0_11 = arith.constant 0 : index
      %12 = vector.load %arg7[%c0_10, %c0_11] : memref<256x128xf32, #tpu.memory_space<vmem>>, vector<256x128xf32>
      %cst_12 = arith.constant 0.000000e+00 : f32
      %13 = vector.broadcast %cst_12 : f32 to vector<256x128xf32>
      %14 = arith.maximumf %12, %13 : vector<256x128xf32>
      %15 = arith.truncf %14 : vector<256x128xf32> to vector<256x128xbf16>
      %c0_13 = arith.constant 0 : index
      %c0_14 = arith.constant 0 : index
      %16 = vector.load %arg6[%c0_13, %c0_14] : memref<256x128xbf16, #tpu.memory_space<vmem>>, vector<256x128xbf16>
      tpu.vector_store %arg6[%c0_13, %c0_14], %15 {strides = array<i32>} : memref<256x128xbf16, #tpu.memory_space<vmem>>, vector<256x128xbf16>,
    } else {
    }
    return
  }
  func.func @transform_0(%arg0: i32, %arg1: i32, %arg2: i32) -> (i32, i32) {
    %c0_i32 = arith.constant 0 : i32
    return %arg0, %arg2 : i32, i32
  }
  func.func @transform_1(%arg0: i32, %arg1: i32, %arg2: i32) -> (i32, i32) {
    %c0_i32 = arith.constant 0 : i32
    return %arg2, %arg1 : i32, i32
  }
  func.func @transform_2(%arg0: i32, %arg1: i32, %arg2: i32) -> (i32, i32) {
    %c0_i32 = arith.constant 0 : i32
    %c0_i32_0 = arith.constant 0 : i32
    return %c0_i32, %arg1 : i32, i32
  }
  func.func @transform_3(%arg0: i32, %arg1: i32, %arg2: i32) -> (i32, i32) {
    %c0_i32 = arith.constant 0 : i32
    return %arg0, %arg1 : i32, i32
  }
}

</mosaic_0001>

<llo_original>
// kernel: _conv2d_impl.1
$region0: #{_conv2d_impl.1}
  #allocation0 [shape = 'u32[]', space=smem, size = 0x4, offset = 0x4, fixed_abs, tag = 'smem constant byte address 0x4 - core index']
  #allocation1 [shape = 'u32[144,128]{1,0:T(1,128)}', space=vmem, size = 0x12000, scoped, tag = 'internal scratch']
  #allocation2 [shape = 'f32[256,128]{1,0:T(8,128)}', space=vmem, size = 0x20000, scoped, tag = 'scratch operand']
  %s0 = inlined_call_operand.vmem [shape: bf16[1024,256], index: 0, kind: input, shape index: {}]
  %s1 = inlined_call_operand.vmem [shape: bf16[256,128], index: 1, kind: input, shape index: {}]
  %s2 = inlined_call_operand.vmem [shape: f32[1,128], index: 2, kind: input, shape index: {}]
  %s3 = inlined_call_operand.hbm [shape: bf16[1024,128], index: 3, kind: output, shape index: {}]
  %s4 = sld [smem:[#allocation0]]
  $region53: #{_conv2d_impl.1} parent=0
    _
  %s6 = ssub.s32 1, %s4
  %s7 = scalar_select 0, %s6, %s4
  $region1: #{_conv2d_impl.1} parent=0
    #allocation3 [shape = 'u8[131072]{0}', space=vmem, size = 0x20000, scoped, tag = 'output window, operand 0']
    #allocation4 [shape = 's32[2]{0}', space=sflag, size = 0x8, scoped, tag = 'scoped memory for _conv2d_impl.1']
    %8 = vsyncpa [#allocation4], 0
    %s9 = scalar_lea.sflag [#allocation4], 1
    %10 = vsyncpa %s9, 0
    loop: start=0, step=1, limit=6
    $region2: #{_conv2d_impl.1} parent=1 // loop_pre_header
      _
    $region3: #{_conv2d_impl.1} parent=1 // loop_header
      %s12 = sphi 0, %s16
      %p13 = scmp.ge.s32.totalorder %s12, 6
      %s19 = sphi 0, %s38
      %s20 = sphi 0, %s34
      %s21 = sphi 0, %s30
      %s22 = sphi 0, %s19
      %s23 = sphi 0, %s20
      %s24 = sphi 0, %s21
      %s25 = sphi 0, %s22
      %s26 = sphi 0, %s23
      %s27 = sphi 0, %s24
      %s43 = sphi 0, %s45
      %s46 = sphi 0, %s43
      %s47 = sphi 0, %s46
      %s63 = sphi 0, %s47
      %s71 = sphi 0, %s73
      %s74 = sphi 0, %s71
      %s75 = sphi 0, %s74
      %s91 = sphi 0, %s75
      %s97 = sphi 0, %s99
      %s100 = sphi 0, %s97
      %s101 = sphi 0, %s100
      %s117 = sphi 0, %s101
      %s125 = sphi 0, %s127
      %s128 = sphi 0, %s125
      %s129 = sphi 0, %s128
      %s145 = sphi 0, %s129
    $region4: #{_conv2d_impl.1} parent=1 // loop_header_branch
      %15 = sbr.rel (%p13) target = $region8
    $region5: #{_conv2d_impl.1} parent=1 // loop_body
      %s17 = ssub.s32 %s12, 1
      %s18 = ssub.s32 %s12, 2
      %s28 = sadd.s32 1, %s21
      %p29 = scmp.ge.s32.totalorder %s28, 1
      %s30 = scalar_select %p29, 0, %s28
      %s31 = sadd.s32 1, %s20
      %s32 = scalar_select %p29, %s31, %s20
      %p33 = scmp.ge.s32.totalorder %s32, 1
      %s34 = scalar_select %p33, 0, %s32
      %s35 = sadd.s32 1, %s19
      %s36 = scalar_select %p33, %s35, %s19
      %p37 = scmp.ge.s32.totalorder %s36, 4
      %s38 = scalar_select %p37, 0, %s36
      %s39 = ssub.s32 %s19, %s38
      %s40 = ssub.s32 %s21, %s30
      %s41 = sor.u32 %s39, %s40
      %p42 = scmp.eq.s32.totalorder %s41, 0
      %s44 = sadd.s32 %s43, 1
      %s45 = scalar_select %p42, %s43, %s44
      %p48 = pneg %p42
      %p49 = scmp.eq.s32.totalorder %s12, 3
      %p50 = por %p48, %p49
      %p51 = scmp.ne.s32.totalorder %s43, %s46
      %p52 = scmp.eq.s32.totalorder %s12, 0
      %p53 = por %p51, %p52
      %p54 = scmp.ne.s32.totalorder %s43, %s46
      %p55 = scmp.eq.s32.totalorder %s17, 3
      %p56 = por %p54, %p55
      %p57 = scmp.ne.s32.totalorder %s46, %s47
      %p58 = scmp.eq.s32.totalorder %s17, 0
      %p59 = por %p57, %p58
      %p60 = scmp.ne.s32.totalorder %s46, %s47
      %p61 = scmp.eq.s32.totalorder %s18, 3
      %p62 = por %p60, %p61
      %p64 = scmp.ne.s32.totalorder %s47, %s63
      %p65 = scmp.eq.s32.totalorder %s18, 0
      %p66 = por %p64, %p65
      %s67 = ssub.s32 %s21, %s30
      %s68 = ssub.s32 %s20, %s34
      %s69 = sor.u32 %s67, %s68
      %p70 = scmp.eq.s32.totalorder %s69, 0
      %s72 = sadd.s32 %s71, 1
      %s73 = scalar_select %p70, %s71, %s72
      %p76 = pneg %p70
      %p77 = scmp.eq.s32.totalorder %s12, 3
      %p78 = por %p76, %p77
      %p79 = scmp.ne.s32.totalorder %s71, %s74
      %p80 = scmp.eq.s32.totalorder %s12, 0
      %p81 = por %p79, %p80
      %p82 = scmp.ne.s32.totalorder %s71, %s74
      %p83 = scmp.eq.s32.totalorder %s17, 3
      %p84 = por %p82, %p83
      %p85 = scmp.ne.s32.totalorder %s74, %s75
      %p86 = scmp.eq.s32.totalorder %s17, 0
      %p87 = por %p85, %p86
      %p88 = scmp.ne.s32.totalorder %s74, %s75
      %p89 = scmp.eq.s32.totalorder %s18, 3
      %p90 = por %p88, %p89
      %p92 = scmp.ne.s32.totalorder %s75, %s91
      %p93 = scmp.eq.s32.totalorder %s18, 0
      %p94 = por %p92, %p93
      %s95 = ssub.s32 %s20, %s34
      %p96 = scmp.eq.s32.totalorder %s95, 0
      %s98 = sadd.s32 %s97, 1
      %s99 = scalar_select %p96, %s97, %s98
      %p102 = pneg %p96
      %p103 = scmp.eq.s32.totalorder %s12, 3
      %p104 = por %p102, %p103
      %p105 = scmp.ne.s32.totalorder %s97, %s100
      %p106 = scmp.eq.s32.totalorder %s12, 0
      %p107 = por %p105, %p106
      %p108 = scmp.ne.s32.totalorder %s97, %s100
      %p109 = scmp.eq.s32.totalorder %s17, 3
      %p110 = por %p108, %p109
      %p111 = scmp.ne.s32.totalorder %s100, %s101
      %p112 = scmp.eq.s32.totalorder %s17, 0
      %p113 = por %p111, %p112
      %p114 = scmp.ne.s32.totalorder %s100, %s101
      %p115 = scmp.eq.s32.totalorder %s18, 3
      %p116 = por %p114, %p115
      %p118 = scmp.ne.s32.totalorder %s101, %s117
      %p119 = scmp.eq.s32.totalorder %s18, 0
      %p120 = por %p118, %p119
      %s121 = ssub.s32 %s19, %s38
      %s122 = ssub.s32 %s20, %s34
      %s123 = sor.u32 %s121, %s122
      %p124 = scmp.eq.s32.totalorder %s123, 0
      %s126 = sadd.s32 %s125, 1
      %s127 = scalar_select %p124, %s125, %s126
      %p130 = pneg %p124
      %p131 = scmp.eq.s32.totalorder %s12, 3
      %p132 = por %p130, %p131
      %p133 = scmp.ne.s32.totalorder %s125, %s128
      %p134 = scmp.eq.s32.totalorder %s12, 0
      %p135 = por %p133, %p134
      %p136 = scmp.ne.s32.totalorder %s125, %s128
      %p137 = scmp.eq.s32.totalorder %s17, 3
      %p138 = por %p136, %p137
      %p139 = scmp.ne.s32.totalorder %s128, %s129
      %p140 = scmp.eq.s32.totalorder %s17, 0
      %p141 = por %p139, %p140
      %p142 = scmp.ne.s32.totalorder %s128, %s129
      %p143 = scmp.eq.s32.totalorder %s18, 3
      %p144 = por %p142, %p143
      %p146 = scmp.ne.s32.totalorder %s129, %s145
      %p147 = scmp.eq.s32.totalorder %s18, 0
      %p148 = por %p146, %p147
      %p149 = scmp.le.s32.totalorder 1, %s12
      %p150 = scmp.lt.s32.totalorder %s12, 5
      %p151 = pnand %p149, %p150
      %p152 = pneg %p151
      // Predicated region
      $region9: #{_conv2d_impl.1} parent=5 // pred_check
        _
      $region10: #{_conv2d_impl.1} parent=5 // pred_check_branch
        %154 = sbr.rel (%p151) target = $region12
      $region11: #{_conv2d_impl.1} parent=5 // pred_region
        %s155 = ssub.s32 %s12, 1
        // Predicated region
        $region13: #{_conv2d_impl.1} parent=11 // pred_check
          %p156 = pneg %p87
        $region14: #{_conv2d_impl.1} parent=11 // pred_check_branch
          %158 = sbr.rel (%p156) target = $region16
        $region15: #{_conv2d_impl.1} parent=11 // pred_region
          %s159 = smul.u32 32, %s24
          %p160 = scmp.lt.s32.totalorder %s159, 31
          %s161 = scalar_select %p160, %s159, 31
          %p162 = scmp.lt.s32.totalorder %s23, 0
          %s163 = scalar_select %p162, %s23, 0
          %s164 = sadd.s32 %s163, %s161
          %s165 = smul.addr %s164, 4
          %s166 = scalar_lea.vmem %s1, %s165
          %s167 = smul.u32 32, %s24
        $region16: #{_conv2d_impl.1} parent=11 // pred_fallthru
          _
        // Predicated region
        $region17: #{_conv2d_impl.1} parent=11 // pred_check
          %p168 = pneg %p113
        $region18: #{_conv2d_impl.1} parent=11 // pred_check_branch
          %170 = sbr.rel (%p168) target = $region20
        $region19: #{_conv2d_impl.1} parent=11 // pred_region
          %p171 = scmp.lt.s32.totalorder %s23, 0
          %s172 = scalar_select %p171, %s23, 0
          %s173 = scalar_lea.vmem %s2, %s172
        $region20: #{_conv2d_impl.1} parent=11 // pred_fallthru
          _
      $region12: #{_conv2d_impl.1} parent=5 // pred_fallthru
        _
      %p174 = scmp.lt.s32.totalorder %s12, 4
      // Predicated region
      $region21: #{_conv2d_impl.1} parent=5 // pred_check
        %p175 = pneg %p174
      $region22: #{_conv2d_impl.1} parent=5 // pred_check_branch
        %177 = sbr.rel (%p175) target = $region24
      $region23: #{_conv2d_impl.1} parent=5 // pred_region
        // Predicated region
        $region25: #{_conv2d_impl.1} parent=23 // pred_check
          %p178 = pneg %p53
        $region26: #{_conv2d_impl.1} parent=23 // pred_check_branch
          %180 = sbr.rel (%p178) target = $region28
        $region27: #{_conv2d_impl.1} parent=23 // pred_region
          %s181 = smul.u32 32, %s19
          %s182 = smul.u32 2, %s21
          %p183 = scmp.lt.s32.totalorder %s181, 127
          %s184 = scalar_select %p183, %s181, 127
          %p185 = scmp.lt.s32.totalorder %s182, 1
          %s186 = scalar_select %p185, %s182, 1
          %s187 = smul.addr %s184, 2
          %s188 = sadd.s32 %s186, %s187
          %s189 = smul.addr %s188, 4
          %s190 = scalar_lea.vmem %s0, %s189
          %s191 = smul.u32 32, %s19
          %s192 = smul.u32 2, %s21
        $region28: #{_conv2d_impl.1} parent=23 // pred_fallthru
          _
      $region24: #{_conv2d_impl.1} parent=5 // pred_fallthru
        _
      %p193 = scmp.le.s32.totalorder 1, %s12
      %p194 = scmp.lt.s32.totalorder %s12, 5
      %p195 = pnand %p193, %p194
      %p196 = pneg %p195
      // Predicated region
      $region29: #{_conv2d_impl.1} parent=5 // pred_check
        _
      $region30: #{_conv2d_impl.1} parent=5 // pred_check_branch
        %198 = sbr.rel (%p195) target = $region32
      $region31: #{_conv2d_impl.1} parent=5 // pred_region
        %s199 = ssub.s32 %s12, 1
        %s200 = smul.u32 32, %s22
        %s201 = smul.u32 2, %s24
        %p202 = scmp.lt.s32.totalorder %s200, 127
        %s203 = scalar_select %p202, %s200, 127
        %p204 = scmp.lt.s32.totalorder %s201, 1
        %s205 = scalar_select %p204, %s201, 1
        %s206 = smul.addr %s203, 2
        %s207 = sadd.s32 %s205, %s206
        %s208 = smul.addr %s207, 4
        %s209 = scalar_lea.vmem %s0, %s208
        %p210 = pneg %p59
        %p211 = pneg %p56
        %s212 = smul.u32 32, %s24
        %p213 = scmp.lt.s32.totalorder %s212, 31
        %s214 = scalar_select %p213, %s212, 31
        %p215 = scmp.lt.s32.totalorder %s23, 0
        %s216 = scalar_select %p215, %s23, 0
        %s217 = sadd.s32 %s216, %s214
        %s218 = smul.addr %s217, 4
        %s219 = scalar_lea.vmem %s1, %s218
        %p220 = pneg %p87
        %p221 = pneg %p84
        %p222 = scmp.lt.s32.totalorder %s23, 0
        %s223 = scalar_select %p222, %s23, 0
        %s224 = scalar_lea.vmem %s2, %s223
        %p225 = pneg %p113
        %p226 = pneg %p110
        %p227 = pneg %p141
        %p228 = pneg %p138
        %s229 = sand.u32 %s128, 1
        %s230 = scalar_lea.sflag [#allocation4], %s229
        %s231 = sand.u32 %s128, 1
        %s232 = smul.addr %s231, 128
        %s233 = scalar_lea.vmem [#allocation3], %s232
        %s234 = smul.u32 32, %s22
        %s235 = smul.u32 2, %s24
        %p236 = scmp.lt.s32.totalorder %s234, 127
        %s237 = scalar_select %p236, %s234, 127
        %p238 = scmp.lt.s32.totalorder %s235, 1
        %s239 = scalar_select %p238, %s235, 1
        %s240 = smul.addr %s237, 2
        %s241 = sadd.s32 %s239, %s240
        %s242 = smul.addr %s241, 4
        %s243 = scalar_lea.vmem %s0, %s242
        %s244 = smul.u32 32, %s22
        %s245 = smul.u32 2, %s24
        %s246 = smul.u32 32, %s24
        %p247 = scmp.lt.s32.totalorder %s246, 31
        %s248 = scalar_select %p247, %s246, 31
        %p249 = scmp.lt.s32.totalorder %s23, 0
        %s250 = scalar_select %p249, %s23, 0
        %s251 = sadd.s32 %s250, %s248
        %s252 = smul.addr %s251, 4
        %s253 = scalar_lea.vmem %s1, %s252
        %s254 = smul.u32 32, %s24
        %p255 = scmp.lt.s32.totalorder %s23, 0
        %s256 = scalar_select %p255, %s23, 0
        %s257 = scalar_lea.vmem %s2, %s256
        %s258 = smul.u32 32, %s22
        %p260 = scmp.eq.s32.totalorder %s24, 0
        // Predicated region
        $region33: #{_conv2d_impl.1} parent=31 // pred_check
          %p261 = pneg %p260
        $region34: #{_conv2d_impl.1} parent=31 // pred_check_branch
          %263 = sbr.rel (%p261) target = $region36
        $region35: #{_conv2d_impl.1} parent=31 // pred_region
          %v264 = vld [vmem:[%s257] sm:$0x1]
          %v266 = vlaneseq
          %v267 = vshrl.u32 %v266, 7
          %v268 = vsub.s32 0, %v267
          %v269 = vrot.slane %v264, %v268
          %271 = vst [vmem:[#allocation2] sm:$0xff] %v269
          %272 = vst [vmem:[#allocation2 + $0x8] sm:$0xff] %v269
          %273 = vst [vmem:[#allocation2 + $0x10] sm:$0xff] %v269
          %274 = vst [vmem:[#allocation2 + $0x18] sm:$0xff] %v269
          %275 = vst [vmem:[#allocation2 + $0x20] sm:$0xff] %v269
          %276 = vst [vmem:[#allocation2 + $0x28] sm:$0xff] %v269
          %277 = vst [vmem:[#allocation2 + $0x30] sm:$0xff] %v269
          %278 = vst [vmem:[#allocation2 + $0x38] sm:$0xff] %v269
          %279 = vst [vmem:[#allocation2 + $0x40] sm:$0xff] %v269
          %280 = vst [vmem:[#allocation2 + $0x48] sm:$0xff] %v269
          %281 = vst [vmem:[#allocation2 + $0x50] sm:$0xff] %v269
          %282 = vst [vmem:[#allocation2 + $0x58] sm:$0xff] %v269
          %283 = vst [vmem:[#allocation2 + $0x60] sm:$0xff] %v269
          %284 = vst [vmem:[#allocation2 + $0x68] sm:$0xff] %v269
          %285 = vst [vmem:[#allocation2 + $0x70] sm:$0xff] %v269
          %286 = vst [vmem:[#allocation2 + $0x78] sm:$0xff] %v269
          %287 = vst [vmem:[#allocation2 + $0x80] sm:$0xff] %v269
          %288 = vst [vmem:[#allocation2 + $0x88] sm:$0xff] %v269
          %289 = vst [vmem:[#allocation2 + $0x90] sm:$0xff] %v269
          %290 = vst [vmem:[#allocation2 + $0x98] sm:$0xff] %v269
          %291 = vst [vmem:[#allocation2 + $0xa0] sm:$0xff] %v269
          %292 = vst [vmem:[#allocation2 + $0xa8] sm:$0xff] %v269
          %293 = vst [vmem:[#allocation2 + $0xb0] sm:$0xff] %v269
          %294 = vst [vmem:[#allocation2 + $0xb8] sm:$0xff] %v269
          %295 = vst [vmem:[#allocation2 + $0xc0] sm:$0xff] %v269
          %296 = vst [vmem:[#allocation2 + $0xc8] sm:$0xff] %v269
          %297 = vst [vmem:[#allocation2 + $0xd0] sm:$0xff] %v269
          %298 = vst [vmem:[#allocation2 + $0xd8] sm:$0xff] %v269
          %299 = vst [vmem:[#allocation2 + $0xe0] sm:$0xff] %v269
          %300 = vst [vmem:[#allocation2 + $0xe8] sm:$0xff] %v269
          %301 = vst [vmem:[#allocation2 + $0xf0] sm:$0xff] %v269
          %302 = vst [vmem:[#allocation2 + $0xf8] sm:$0xff] %v269
        $region36: #{_conv2d_impl.1} parent=31 // pred_fallthru
          _
        %v303 = vld [vmem:[#allocation2] sm:$0xff]
        %v304 = vld [vmem:[#allocation2 + $0x8] sm:$0xff]
        %v305 = vld [vmem:[#allocation2 + $0x10] sm:$0xff]
        %v306 = vld [vmem:[#allocation2 + $0x18] sm:$0xff]
        %v307 = vld [vmem:[#allocation2 + $0x20] sm:$0xff]
        %v308 = vld [vmem:[#allocation2 + $0x28] sm:$0xff]
        %v309 = vld [vmem:[#allocation2 + $0x30] sm:$0xff]
        %v310 = vld [vmem:[#allocation2 + $0x38] sm:$0xff]
        %v311 = vld [vmem:[#allocation2 + $0x40] sm:$0xff]
        %v312 = vld [vmem:[#allocation2 + $0x48] sm:$0xff]
        %v313 = vld [vmem:[#allocation2 + $0x50] sm:$0xff]
        %v314 = vld [vmem:[#allocation2 + $0x58] sm:$0xff]
        %v315 = vld [vmem:[#allocation2 + $0x60] sm:$0xff]
        %v316 = vld [vmem:[#allocation2 + $0x68] sm:$0xff]
        %v317 = vld [vmem:[#allocation2 + $0x70] sm:$0xff]
        %v318 = vld [vmem:[#allocation2 + $0x78] sm:$0xff]
        %v319 = vld [vmem:[#allocation2 + $0x80] sm:$0xff]
        %v320 = vld [vmem:[#allocation2 + $0x88] sm:$0xff]
        %v321 = vld [vmem:[#allocation2 + $0x90] sm:$0xff]
        %v322 = vld [vmem:[#allocation2 + $0x98] sm:$0xff]
        %v323 = vld [vmem:[#allocation2 + $0xa0] sm:$0xff]
        %v324 = vld [vmem:[#allocation2 + $0xa8] sm:$0xff]
        %v325 = vld [vmem:[#allocation2 + $0xb0] sm:$0xff]
        %v326 = vld [vmem:[#allocation2 + $0xb8] sm:$0xff]
        %v327 = vld [vmem:[#allocation2 + $0xc0] sm:$0xff]
        %v328 = vld [vmem:[#allocation2 + $0xc8] sm:$0xff]
        %v329 = vld [vmem:[#allocation2 + $0xd0] sm:$0xff]
        %v330 = vld [vmem:[#allocation2 + $0xd8] sm:$0xff]
        %v331 = vld [vmem:[#allocation2 + $0xe0] sm:$0xff]
        %v332 = vld [vmem:[#allocation2 + $0xe8] sm:$0xff]
        %v333 = vld [vmem:[#allocation2 + $0xf0] sm:$0xff]
        %v334 = vld [vmem:[#allocation2 + $0xf8] sm:$0xff]
        %v335 = vld [vmem:[%s243] sm:$0xff]
        %v336 = vld [vmem:[%s243 + $0x8] sm:$0xff]
        %v337 = vld [vmem:[%s243 + $0x10] sm:$0xff]
        %v338 = vld [vmem:[%s243 + $0x18] sm:$0xff]
        %v339 = vld [vmem:[%s243 + $0x20] sm:$0xff]
        %v340 = vld [vmem:[%s243 + $0x28] sm:$0xff]
        %v341 = vld [vmem:[%s243 + $0x30] sm:$0xff]
        %v342 = vld [vmem:[%s243 + $0x38] sm:$0xff]
        %v343 = vld [vmem:[%s243 + $0x40] sm:$0xff]
        %v344 = vld [vmem:[%s243 + $0x48] sm:$0xff]
        %v345 = vld [vmem:[%s243 + $0x50] sm:$0xff]
        %v346 = vld [vmem:[%s243 + $0x58] sm:$0xff]
        %v347 = vld [vmem:[%s243 + $0x60] sm:$0xff]
        %v348 = vld [vmem:[%s243 + $0x68] sm:$0xff]
        %v349 = vld [vmem:[%s243 + $0x70] sm:$0xff]
        %v350 = vld [vmem:[%s243 + $0x78] sm:$0xff]
        %v351 = vld [vmem:[%s243 + $0x80] sm:$0xff]
        %v352 = vld [vmem:[%s243 + $0x88] sm:$0xff]
        %v353 = vld [vmem:[%s243 + $0x90] sm:$0xff]
        %v354 = vld [vmem:[%s243 + $0x98] sm:$0xff]
        %v355 = vld [vmem:[%s243 + $0xa0] sm:$0xff]
        %v356 = vld [vmem:[%s243 + $0xa8] sm:$0xff]
        %v357 = vld [vmem:[%s243 + $0xb0] sm:$0xff]
        %v358 = vld [vmem:[%s243 + $0xb8] sm:$0xff]
        %v359 = vld [vmem:[%s243 + $0xc0] sm:$0xff]
        %v360 = vld [vmem:[%s243 + $0xc8] sm:$0xff]
        %v361 = vld [vmem:[%s243 + $0xd0] sm:$0xff]
        %v362 = vld [vmem:[%s243 + $0xd8] sm:$0xff]
        %v363 = vld [vmem:[%s243 + $0xe0] sm:$0xff]
        %v364 = vld [vmem:[%s243 + $0xe8] sm:$0xff]
        %v365 = vld [vmem:[%s243 + $0xf0] sm:$0xff]
        %v366 = vld [vmem:[%s243 + $0xf8] sm:$0xff]
        %v367 = vld [vmem:[%s253] sm:$0xf]
        %v368 = vld [vmem:[%s253 + $0x4] sm:$0xf]
        %v369 = vld [vmem:[%s253 + $0x8] sm:$0xf]
        %v370 = vld [vmem:[%s253 + $0xc] sm:$0xf]
        %v371 = vld [vmem:[%s253 + $0x10] sm:$0xf]
        %v372 = vld [vmem:[%s253 + $0x14] sm:$0xf]
        %v373 = vld [vmem:[%s253 + $0x18] sm:$0xf]
        %v374 = vld [vmem:[%s253 + $0x1c] sm:$0xf]
        %v375 = vld [vmem:[%s253 + $0x20] sm:$0xf]
        %v376 = vld [vmem:[%s253 + $0x24] sm:$0xf]
        %v377 = vld [vmem:[%s253 + $0x28] sm:$0xf]
        %v378 = vld [vmem:[%s253 + $0x2c] sm:$0xf]
        %v379 = vld [vmem:[%s253 + $0x30] sm:$0xf]
        %v380 = vld [vmem:[%s253 + $0x34] sm:$0xf]
        %v381 = vld [vmem:[%s253 + $0x38] sm:$0xf]
        %v382 = vld [vmem:[%s253 + $0x3c] sm:$0xf]
        %v383 = vld [vmem:[%s253 + $0x40] sm:$0xf]
        %v384 = vld [vmem:[%s253 + $0x44] sm:$0xf]
        %v385 = vld [vmem:[%s253 + $0x48] sm:$0xf]
        %v386 = vld [vmem:[%s253 + $0x4c] sm:$0xf]
        %v387 = vld [vmem:[%s253 + $0x50] sm:$0xf]
        %v388 = vld [vmem:[%s253 + $0x54] sm:$0xf]
        %v389 = vld [vmem:[%s253 + $0x58] sm:$0xf]
        %v390 = vld [vmem:[%s253 + $0x5c] sm:$0xf]
        %v391 = vld [vmem:[%s253 + $0x60] sm:$0xf]
        %v392 = vld [vmem:[%s253 + $0x64] sm:$0xf]
        %v393 = vld [vmem:[%s253 + $0x68] sm:$0xf]
        %v394 = vld [vmem:[%s253 + $0x6c] sm:$0xf]
        %v395 = vld [vmem:[%s253 + $0x70] sm:$0xf]
        %v396 = vld [vmem:[%s253 + $0x74] sm:$0xf]
        %v397 = vld [vmem:[%s253 + $0x78] sm:$0xf]
        %v398 = vld [vmem:[%s253 + $0x7c] sm:$0xf]
        %v431 = vunpack.c.l.b16 %v335
        %v432 = vunpack.c.h.b16 %v335
        %v433 = vunpack.c.l.b16 %v336
        %v434 = vunpack.c.h.b16 %v336
        %v435 = vunpack.c.l.b16 %v337
        %v436 = vunpack.c.h.b16 %v337
        %v437 = vunpack.c.l.b16 %v338
        %v438 = vunpack.c.h.b16 %v338
        %v439 = vunpack.c.l.b16 %v339
        %v440 = vunpack.c.h.b16 %v339
        %v441 = vunpack.c.l.b16 %v340
        %v442 = vunpack.c.h.b16 %v340
        %v443 = vunpack.c.l.b16 %v341
        %v444 = vunpack.c.h.b16 %v341
        %v445 = vunpack.c.l.b16 %v342
        %v446 = vunpack.c.h.b16 %v342
        %v447 = vunpack.c.l.b16 %v343
        %v448 = vunpack.c.h.b16 %v343
        %v449 = vunpack.c.l.b16 %v344
        %v450 = vunpack.c.h.b16 %v344
        %v451 = vunpack.c.l.b16 %v345
        %v452 = vunpack.c.h.b16 %v345
        %v453 = vunpack.c.l.b16 %v346
        %v454 = vunpack.c.h.b16 %v346
        %v455 = vunpack.c.l.b16 %v347
        %v456 = vunpack.c.h.b16 %v347
        %v457 = vunpack.c.l.b16 %v348
        %v458 = vunpack.c.h.b16 %v348
        %v459 = vunpack.c.l.b16 %v349
        %v460 = vunpack.c.h.b16 %v349
        %v461 = vunpack.c.l.b16 %v350
        %v462 = vunpack.c.h.b16 %v350
        %v463 = vunpack.c.l.b16 %v351
        %v464 = vunpack.c.h.b16 %v351
        %v465 = vunpack.c.l.b16 %v352
        %v466 = vunpack.c.h.b16 %v352
        %v467 = vunpack.c.l.b16 %v353
        %v468 = vunpack.c.h.b16 %v353
        %v469 = vunpack.c.l.b16 %v354
        %v470 = vunpack.c.h.b16 %v354
        %v471 = vunpack.c.l.b16 %v355
        %v472 = vunpack.c.h.b16 %v355
        %v473 = vunpack.c.l.b16 %v356
        %v474 = vunpack.c.h.b16 %v356
        %v475 = vunpack.c.l.b16 %v357
        %v476 = vunpack.c.h.b16 %v357
        %v477 = vunpack.c.l.b16 %v358
        %v478 = vunpack.c.h.b16 %v358
        %v479 = vunpack.c.l.b16 %v359
        %v480 = vunpack.c.h.b16 %v359
        %v481 = vunpack.c.l.b16 %v360
        %v482 = vunpack.c.h.b16 %v360
        %v483 = vunpack.c.l.b16 %v361
        %v484 = vunpack.c.h.b16 %v361
        %v485 = vunpack.c.l.b16 %v362
        %v486 = vunpack.c.h.b16 %v362
        %v487 = vunpack.c.l.b16 %v363
        %v488 = vunpack.c.h.b16 %v363
        %v489 = vunpack.c.l.b16 %v364
        %v490 = vunpack.c.h.b16 %v364
        %v491 = vunpack.c.l.b16 %v365
        %v492 = vunpack.c.h.b16 %v365
        %v493 = vunpack.c.l.b16 %v366
        %v494 = vunpack.c.h.b16 %v366
        %v495 = vpack.c.b16 %v433, %v431
        %v496 = vpack.c.b16 %v434, %v432
        %v497 = vpack.c.b16 %v437, %v435
        %v498 = vpack.c.b16 %v438, %v436
        %v499 = vpack.c.b16 %v441, %v439
        %v500 = vpack.c.b16 %v442, %v440
        %v501 = vpack.c.b16 %v445, %v443
        %v502 = vpack.c.b16 %v446, %v444
        %v503 = vpack.c.b16 %v449, %v447
        %v504 = vpack.c.b16 %v450, %v448
        %v505 = vpack.c.b16 %v453, %v451
        %v506 = vpack.c.b16 %v454, %v452
        %v507 = vpack.c.b16 %v457, %v455
        %v508 = vpack.c.b16 %v458, %v456
        %v509 = vpack.c.b16 %v461, %v459
        %v510 = vpack.c.b16 %v462, %v460
        %v511 = vpack.c.b16 %v465, %v463
        %v512 = vpack.c.b16 %v466, %v464
        %v513 = vpack.c.b16 %v469, %v467
        %v514 = vpack.c.b16 %v470, %v468
        %v515 = vpack.c.b16 %v473, %v471
        %v516 = vpack.c.b16 %v474, %v472
        %v517 = vpack.c.b16 %v477, %v475
        %v518 = vpack.c.b16 %v478, %v476
        %v519 = vpack.c.b16 %v481, %v479
        %v520 = vpack.c.b16 %v482, %v480
        %v521 = vpack.c.b16 %v485, %v483
        %v522 = vpack.c.b16 %v486, %v484
        %v523 = vpack.c.b16 %v489, %v487
        %v524 = vpack.c.b16 %v490, %v488
        %v525 = vpack.c.b16 %v493, %v491
        %v526 = vpack.c.b16 %v494, %v492
        %v591 = vunpack.c.l.b16 %v367
        %v592 = vunpack.c.l.b16 %v368
        %v593 = vunpack.c.l.b16 %v369
        %v594 = vunpack.c.l.b16 %v370
        %v595 = vunpack.c.l.b16 %v371
        %v596 = vunpack.c.l.b16 %v372
        %v597 = vunpack.c.l.b16 %v373
        %v598 = vunpack.c.l.b16 %v374
        %v599 = vunpack.c.l.b16 %v375
        %v600 = vunpack.c.l.b16 %v376
        %v601 = vunpack.c.l.b16 %v377
        %v602 = vunpack.c.l.b16 %v378
        %v603 = vunpack.c.l.b16 %v379
        %v604 = vunpack.c.l.b16 %v380
        %v605 = vunpack.c.l.b16 %v381
        %v606 = vunpack.c.l.b16 %v382
        %v607 = vunpack.c.l.b16 %v383
        %v608 = vunpack.c.l.b16 %v384
        %v609 = vunpack.c.l.b16 %v385
        %v610 = vunpack.c.l.b16 %v386
        %v611 = vunpack.c.l.b16 %v387
        %v612 = vunpack.c.l.b16 %v388
        %v613 = vunpack.c.l.b16 %v389
        %v614 = vunpack.c.l.b16 %v390
        %v615 = vunpack.c.l.b16 %v391
        %v616 = vunpack.c.l.b16 %v392
        %v617 = vunpack.c.l.b16 %v393
        %v618 = vunpack.c.l.b16 %v394
        %v619 = vunpack.c.l.b16 %v395
        %v620 = vunpack.c.l.b16 %v396
        %v621 = vunpack.c.l.b16 %v397
        %v622 = vunpack.c.l.b16 %v398
        %v623 = vpack.c.b16 %v592, %v591
        %v624 = vpack.c.b16 %v594, %v593
        %v625 = vpack.c.b16 %v596, %v595
        %v626 = vpack.c.b16 %v598, %v597
        %v627 = vpack.c.b16 %v600, %v599
        %v628 = vpack.c.b16 %v602, %v601
        %v629 = vpack.c.b16 %v604, %v603
        %v630 = vpack.c.b16 %v606, %v605
        %v631 = vpack.c.b16 %v608, %v607
        %v632 = vpack.c.b16 %v610, %v609
        %v633 = vpack.c.b16 %v612, %v611
        %v634 = vpack.c.b16 %v614, %v613
        %v635 = vpack.c.b16 %v616, %v615
        %v636 = vpack.c.b16 %v618, %v617
        %v637 = vpack.c.b16 %v620, %v619
        %v638 = vpack.c.b16 %v622, %v621
        %655 = vmatprep.subr.bf16.mxu0 0
        %656 = vmatpush1.bf16.msra.mxu0 %v623
        %657 = vmatprep.subr.bf16.mxu0 0
        %658 = vmatpush1.bf16.msra.mxu0 %v624
        %659 = vmatprep.subr.bf16.mxu0 0
        %660 = vmatpush1.bf16.msra.mxu0 %v625
        %661 = vmatprep.subr.bf16.mxu0 0
        %662 = vmatpush1.bf16.msra.mxu0 %v626
        %663 = vmatprep.subr.bf16.mxu0 0
        %664 = vmatpush1.bf16.msra.mxu0 %v627
        %665 = vmatprep.subr.bf16.mxu0 0
        %666 = vmatpush1.bf16.msra.mxu0 %v628
        %667 = vmatprep.subr.bf16.mxu0 0
        %668 = vmatpush1.bf16.msra.mxu0 %v629
        %669 = vmatprep.subr.bf16.mxu0 0
        %670 = vmatpush1.bf16.msra.mxu0 %v630
        %671 = vmatprep.subr.bf16.mxu0 0
        %672 = vmatpush1.bf16.msra.mxu0 %v631
        %673 = vmatprep.subr.bf16.mxu0 0
        %674 = vmatpush1.bf16.msra.mxu0 %v632
        %675 = vmatprep.subr.bf16.mxu0 0
        %676 = vmatpush1.bf16.msra.mxu0 %v633
        %677 = vmatprep.subr.bf16.mxu0 0
        %678 = vmatpush1.bf16.msra.mxu0 %v634
        %679 = vmatprep.subr.bf16.mxu0 0
        %680 = vmatpush1.bf16.msra.mxu0 %v635
        %681 = vmatprep.subr.bf16.mxu0 0
        %682 = vmatpush1.bf16.msra.mxu0 %v636
        %683 = vmatprep.subr.bf16.mxu0 0
        %684 = vmatpush1.bf16.msra.mxu0 %v637
        %685 = vmatprep.subr.bf16.mxu0 0
        %686 = vmatpush1.bf16.msra.mxu0 %v638
        %687 = vmatprep.mubr.bf16.mxu0 %v496
        %688 = vmatmul.mubr.bf16.gmra.mrb[0].mxu0 %v495
        %v689 = vpop.f32.mrb[0].mxu0
        %v690 = vadd.f32 0.0, %v689
        %v691 = vpop.f32.mrb[0].mxu0
        %v692 = vpop.f32.mrb[0].mxu0
        %v693 = vadd.f32 0.0, %v692
        %v694 = vpop.f32.mrb[0].mxu0
        %695 = vmatprep.mubr.bf16.mxu0 %v498
        %696 = vmatmul.mubr.bf16.gmra.mrb[0].mxu0 %v497
        %v697 = vpop.f32.mrb[0].mxu0
        %v698 = vadd.f32 0.0, %v697
        %v699 = vpop.f32.mrb[0].mxu0
        %v700 = vpop.f32.mrb[0].mxu0
        %v701 = vadd.f32 0.0, %v700
        %v702 = vpop.f32.mrb[0].mxu0
        %703 = vmatprep.mubr.bf16.mxu0 %v500
        %704 = vmatmul.mubr.bf16.gmra.mrb[0].mxu0 %v499
        %v705 = vpop.f32.mrb[0].mxu0
        %v706 = vadd.f32 0.0, %v705
        %v707 = vpop.f32.mrb[0].mxu0
        %v708 = vpop.f32.mrb[0].mxu0
        %v709 = vadd.f32 0.0, %v708
        %v710 = vpop.f32.mrb[0].mxu0
        %711 = vmatprep.mubr.bf16.mxu0 %v502
        %712 = vmatmul.mubr.bf16.gmra.mrb[0].mxu0 %v501
        %v713 = vpop.f32.mrb[0].mxu0
        %v714 = vadd.f32 0.0, %v713
        %v715 = vpop.f32.mrb[0].mxu0
        %v716 = vpop.f32.mrb[0].mxu0
        %v717 = vadd.f32 0.0, %v716
        %v718 = vpop.f32.mrb[0].mxu0
        %719 = vmatprep.mubr.bf16.mxu0 %v504
        %720 = vmatmul.mubr.bf16.gmra.mrb[0].mxu0 %v503
        %v721 = vpop.f32.mrb[0].mxu0
        %v722 = vadd.f32 0.0, %v721
        %v723 = vpop.f32.mrb[0].mxu0
        %v724 = vpop.f32.mrb[0].mxu0
        %v725 = vadd.f32 0.0, %v724
        %v726 = vpop.f32.mrb[0].mxu0
        %727 = vmatprep.mubr.bf16.mxu0 %v506
        %728 = vmatmul.mubr.bf16.gmra.mrb[0].mxu0 %v505
        %v729 = vpop.f32.mrb[0].mxu0
        %v730 = vadd.f32 0.0, %v729
        %v731 = vpop.f32.mrb[0].mxu0
        %v732 = vpop.f32.mrb[0].mxu0
        %v733 = vadd.f32 0.0, %v732
        %v734 = vpop.f32.mrb[0].mxu0
        %735 = vmatprep.mubr.bf16.mxu0 %v508
        %736 = vmatmul.mubr.bf16.gmra.mrb[0].mxu0 %v507
        %v737 = vpop.f32.mrb[0].mxu0
        %v738 = vadd.f32 0.0, %v737
        %v739 = vpop.f32.mrb[0].mxu0
        %v740 = vpop.f32.mrb[0].mxu0
        %v741 = vadd.f32 0.0, %v740
        %v742 = vpop.f32.mrb[0].mxu0
        %743 = vmatprep.mubr.bf16.mxu0 %v510
        %744 = vmatmul.mubr.bf16.gmra.mrb[0].mxu0 %v509
        %v745 = vpop.f32.mrb[0].mxu0
        %v746 = vadd.f32 0.0, %v745
        %v747 = vpop.f32.mrb[0].mxu0
        %v748 = vpop.f32.mrb[0].mxu0
        %v749 = vadd.f32 0.0, %v748
        %v750 = vpop.f32.mrb[0].mxu0
        %751 = vmatprep.mubr.bf16.mxu0 %v512
        %752 = vmatmul.mubr.bf16.gmra.mrb[0].mxu0 %v511
        %v753 = vpop.f32.mrb[0].mxu0
        %v754 = vadd.f32 0.0, %v753
        %v755 = vpop.f32.mrb[0].mxu0
        %v756 = vpop.f32.mrb[0].mxu0
        %v757 = vadd.f32 0.0, %v756
        %v758 = vpop.f32.mrb[0].mxu0
        %759 = vmatprep.mubr.bf16.mxu0 %v514
        %760 = vmatmul.mubr.bf16.gmra.mrb[0].mxu0 %v513
        %v761 = vpop.f32.mrb[0].mxu0
        %v762 = vadd.f32 0.0, %v761
        %v763 = vpop.f32.mrb[0].mxu0
        %v764 = vpop.f32.mrb[0].mxu0
        %v765 = vadd.f32 0.0, %v764
        %v766 = vpop.f32.mrb[0].mxu0
        %767 = vmatprep.mubr.bf16.mxu0 %v516
        %768 = vmatmul.mubr.bf16.gmra.mrb[0].mxu0 %v515
        %v769 = vpop.f32.mrb[0].mxu0
        %v770 = vadd.f32 0.0, %v769
        %v771 = vpop.f32.mrb[0].mxu0
        %v772 = vpop.f32.mrb[0].mxu0
        %v773 = vadd.f32 0.0, %v772
        %v774 = vpop.f32.mrb[0].mxu0
        %775 = vmatprep.mubr.bf16.mxu0 %v518
        %776 = vmatmul.mubr.bf16.gmra.mrb[0].mxu0 %v517
        %v777 = vpop.f32.mrb[0].mxu0
        %v778 = vadd.f32 0.0, %v777
        %v779 = vpop.f32.mrb[0].mxu0
        %v780 = vpop.f32.mrb[0].mxu0
        %v781 = vadd.f32 0.0, %v780
        %v782 = vpop.f32.mrb[0].mxu0
        %783 = vmatprep.mubr.bf16.mxu0 %v520
        %784 = vmatmul.mubr.bf16.gmra.mrb[0].mxu0 %v519
        %v785 = vpop.f32.mrb[0].mxu0
        %v786 = vadd.f32 0.0, %v785
        %v787 = vpop.f32.mrb[0].mxu0
        %v788 = vpop.f32.mrb[0].mxu0
        %v789 = vadd.f32 0.0, %v788
        %v790 = vpop.f32.mrb[0].mxu0
        %791 = vmatprep.mubr.bf16.mxu0 %v522
        %792 = vmatmul.mubr.bf16.gmra.mrb[0].mxu0 %v521
        %v793 = vpop.f32.mrb[0].mxu0
        %v794 = vadd.f32 0.0, %v793
        %v795 = vpop.f32.mrb[0].mxu0
        %v796 = vpop.f32.mrb[0].mxu0
        %v797 = vadd.f32 0.0, %v796
        %v798 = vpop.f32.mrb[0].mxu0
        %799 = vmatprep.mubr.bf16.mxu0 %v524
        %800 = vmatmul.mubr.bf16.gmra.mrb[0].mxu0 %v523
        %v801 = vpop.f32.mrb[0].mxu0
        %v802 = vadd.f32 0.0, %v801
        %v803 = vpop.f32.mrb[0].mxu0
        %v804 = vpop.f32.mrb[0].mxu0
        %v805 = vadd.f32 0.0, %v804
        %v806 = vpop.f32.mrb[0].mxu0
        %807 = vmatprep.mubr.bf16.mxu0 %v526
        %808 = vmatmul.mubr.bf16.gmra.mrb[0].mxu0 %v525
        %v809 = vpop.f32.mrb[0].mxu0
        %v810 = vadd.f32 0.0, %v809
        %v811 = vpop.f32.mrb[0].mxu0
        %v812 = vpop.f32.mrb[0].mxu0
        %v813 = vadd.f32 0.0, %v812
        %v814 = vpop.f32.mrb[0].mxu0
        %815 = vdwg.mxu0
        %v816 = vadd.f32 %v303, %v690
        %v817 = vadd.f32 %v304, %v693
        %v818 = vadd.f32 %v305, %v698
        %v819 = vadd.f32 %v306, %v701
        %v820 = vadd.f32 %v307, %v706
        %v821 = vadd.f32 %v308, %v709
        %v822 = vadd.f32 %v309, %v714
        %v823 = vadd.f32 %v310, %v717
        %v824 = vadd.f32 %v311, %v722
        %v825 = vadd.f32 %v312, %v725
        %v826 = vadd.f32 %v313, %v730
        %v827 = vadd.f32 %v314, %v733
        %v828 = vadd.f32 %v315, %v738
        %v829 = vadd.f32 %v316, %v741
        %v830 = vadd.f32 %v317, %v746
        %v831 = vadd.f32 %v318, %v749
        %v832 = vadd.f32 %v319, %v754
        %v833 = vadd.f32 %v320, %v757
        %v834 = vadd.f32 %v321, %v762
        %v835 = vadd.f32 %v322, %v765
        %v836 = vadd.f32 %v323, %v770
        %v837 = vadd.f32 %v324, %v773
        %v838 = vadd.f32 %v325, %v778
        %v839 = vadd.f32 %v326, %v781
        %v840 = vadd.f32 %v327, %v786
        %v841 = vadd.f32 %v328, %v789
        %v842 = vadd.f32 %v329, %v794
        %v843 = vadd.f32 %v330, %v797
        %v844 = vadd.f32 %v331, %v802
        %v845 = vadd.f32 %v332, %v805
        %v846 = vadd.f32 %v333, %v810
        %v847 = vadd.f32 %v334, %v813
        %848 = vst [vmem:[#allocation2] sm:$0xff] %v816
        %849 = vst [vmem:[#allocation2 + $0x8] sm:$0xff] %v817
        %850 = vst [vmem:[#allocation2 + $0x10] sm:$0xff] %v818
        %851 = vst [vmem:[#allocation2 + $0x18] sm:$0xff] %v819
        %852 = vst [vmem:[#allocation2 + $0x20] sm:$0xff] %v820
        %853 = vst [vmem:[#allocation2 + $0x28] sm:$0xff] %v821
        %854 = vst [vmem:[#allocation2 + $0x30] sm:$0xff] %v822
        %855 = vst [vmem:[#allocation2 + $0x38] sm:$0xff] %v823
        %856 = vst [vmem:[#allocation2 + $0x40] sm:$0xff] %v824
        %857 = vst [vmem:[#allocation2 + $0x48] sm:$0xff] %v825
        %858 = vst [vmem:[#allocation2 + $0x50] sm:$0xff] %v826
        %859 = vst [vmem:[#allocation2 + $0x58] sm:$0xff] %v827
        %860 = vst [vmem:[#allocation2 + $0x60] sm:$0xff] %v828
        %861 = vst [vmem:[#allocation2 + $0x68] sm:$0xff] %v829
        %862 = vst [vmem:[#allocation2 + $0x70] sm:$0xff] %v830
        %863 = vst [vmem:[#allocation2 + $0x78] sm:$0xff] %v831
        %864 = vst [vmem:[#allocation2 + $0x80] sm:$0xff] %v832
        %865 = vst [vmem:[#allocation2 + $0x88] sm:$0xff] %v833
        %866 = vst [vmem:[#allocation2 + $0x90] sm:$0xff] %v834
        %867 = vst [vmem:[#allocation2 + $0x98] sm:$0xff] %v835
        %868 = vst [vmem:[#allocation2 + $0xa0] sm:$0xff] %v836
        %869 = vst [vmem:[#allocation2 + $0xa8] sm:$0xff] %v837
        %870 = vst [vmem:[#allocation2 + $0xb0] sm:$0xff] %v838
        %871 = vst [vmem:[#allocation2 + $0xb8] sm:$0xff] %v839
        %872 = vst [vmem:[#allocation2 + $0xc0] sm:$0xff] %v840
        %873 = vst [vmem:[#allocation2 + $0xc8] sm:$0xff] %v841
        %874 = vst [vmem:[#allocation2 + $0xd0] sm:$0xff] %v842
        %875 = vst [vmem:[#allocation2 + $0xd8] sm:$0xff] %v843
        %876 = vst [vmem:[#allocation2 + $0xe0] sm:$0xff] %v844
        %877 = vst [vmem:[#allocation2 + $0xe8] sm:$0xff] %v845
        %878 = vst [vmem:[#allocation2 + $0xf0] sm:$0xff] %v846
        %879 = vst [vmem:[#allocation2 + $0xf8] sm:$0xff] %v847
        // Predicated region
        $region37: #{_conv2d_impl.1} parent=31 // pred_check
          %p880 = pneg %p260
        $region38: #{_conv2d_impl.1} parent=31 // pred_check_branch
          %882 = sbr.rel (%p880) target = $region40
        $region39: #{_conv2d_impl.1} parent=31 // pred_region
          %v883 = vld [vmem:[#allocation2] sm:$0xff]
          %v884 = vld [vmem:[#allocation2 + $0x8] sm:$0xff]
          %v885 = vld [vmem:[#allocation2 + $0x10] sm:$0xff]
          %v886 = vld [vmem:[#allocation2 + $0x18] sm:$0xff]
          %v887 = vld [vmem:[#allocation2 + $0x20] sm:$0xff]
          %v888 = vld [vmem:[#allocation2 + $0x28] sm:$0xff]
          %v889 = vld [vmem:[#allocation2 + $0x30] sm:$0xff]
          %v890 = vld [vmem:[#allocation2 + $0x38] sm:$0xff]
          %v891 = vld [vmem:[#allocation2 + $0x40] sm:$0xff]
          %v892 = vld [vmem:[#allocation2 + $0x48] sm:$0xff]
          %v893 = vld [vmem:[#allocation2 + $0x50] sm:$0xff]
          %v894 = vld [vmem:[#allocation2 + $0x58] sm:$0xff]
          %v895 = vld [vmem:[#allocation2 + $0x60] sm:$0xff]
          %v896 = vld [vmem:[#allocation2 + $0x68] sm:$0xff]
          %v897 = vld [vmem:[#allocation2 + $0x70] sm:$0xff]
          %v898 = vld [vmem:[#allocation2 + $0x78] sm:$0xff]
          %v899 = vld [vmem:[#allocation2 + $0x80] sm:$0xff]
          %v900 = vld [vmem:[#allocation2 + $0x88] sm:$0xff]
          %v901 = vld [vmem:[#allocation2 + $0x90] sm:$0xff]
          %v902 = vld [vmem:[#allocation2 + $0x98] sm:$0xff]
          %v903 = vld [vmem:[#allocation2 + $0xa0] sm:$0xff]
          %v904 = vld [vmem:[#allocation2 + $0xa8] sm:$0xff]
          %v905 = vld [vmem:[#allocation2 + $0xb0] sm:$0xff]
          %v906 = vld [vmem:[#allocation2 + $0xb8] sm:$0xff]
          %v907 = vld [vmem:[#allocation2 + $0xc0] sm:$0xff]
          %v908 = vld [vmem:[#allocation2 + $0xc8] sm:$0xff]
          %v909 = vld [vmem:[#allocation2 + $0xd0] sm:$0xff]
          %v910 = vld [vmem:[#allocation2 + $0xd8] sm:$0xff]
          %v911 = vld [vmem:[#allocation2 + $0xe0] sm:$0xff]
          %v912 = vld [vmem:[#allocation2 + $0xe8] sm:$0xff]
          %v913 = vld [vmem:[#allocation2 + $0xf0] sm:$0xff]
          %v914 = vld [vmem:[#allocation2 + $0xf8] sm:$0xff]
          %v915 = vmax.f32 %v883, 0.0
          %v916 = vmax.f32 %v884, 0.0
          %v917 = vmax.f32 %v885, 0.0
          %v918 = vmax.f32 %v886, 0.0
          %v919 = vmax.f32 %v887, 0.0
          %v920 = vmax.f32 %v888, 0.0
          %v921 = vmax.f32 %v889, 0.0
          %v922 = vmax.f32 %v890, 0.0
          %v923 = vmax.f32 %v891, 0.0
          %v924 = vmax.f32 %v892, 0.0
          %v925 = vmax.f32 %v893, 0.0
          %v926 = vmax.f32 %v894, 0.0
          %v927 = vmax.f32 %v895, 0.0
          %v928 = vmax.f32 %v896, 0.0
          %v929 = vmax.f32 %v897, 0.0
          %v930 = vmax.f32 %v898, 0.0
          %v931 = vmax.f32 %v899, 0.0
          %v932 = vmax.f32 %v900, 0.0
          %v933 = vmax.f32 %v901, 0.0
          %v934 = vmax.f32 %v902, 0.0
          %v935 = vmax.f32 %v903, 0.0
          %v936 = vmax.f32 %v904, 0.0
          %v937 = vmax.f32 %v905, 0.0
          %v938 = vmax.f32 %v906, 0.0
          %v939 = vmax.f32 %v907, 0.0
          %v940 = vmax.f32 %v908, 0.0
          %v941 = vmax.f32 %v909, 0.0
          %v942 = vmax.f32 %v910, 0.0
          %v943 = vmax.f32 %v911, 0.0
          %v944 = vmax.f32 %v912, 0.0
          %v945 = vmax.f32 %v913, 0.0
          %v946 = vmax.f32 %v914, 0.0
          %v947 = vpack.c.bf16 %v916, %v915
          %v948 = vpack.c.bf16 %v918, %v917
          %v949 = vpack.c.bf16 %v920, %v919
          %v950 = vpack.c.bf16 %v922, %v921
          %v951 = vpack.c.bf16 %v924, %v923
          %v952 = vpack.c.bf16 %v926, %v925
          %v953 = vpack.c.bf16 %v928, %v927
          %v954 = vpack.c.bf16 %v930, %v929
          %v955 = vpack.c.bf16 %v932, %v931
          %v956 = vpack.c.bf16 %v934, %v933
          %v957 = vpack.c.bf16 %v936, %v935
          %v958 = vpack.c.bf16 %v938, %v937
          %v959 = vpack.c.bf16 %v940, %v939
          %v960 = vpack.c.bf16 %v942, %v941
          %v961 = vpack.c.bf16 %v944, %v943
          %v962 = vpack.c.bf16 %v946, %v945
          %v979 = vunpack.c.l.b16 %v947
          %v980 = vunpack.c.h.b16 %v947
          %v981 = vunpack.c.l.b16 %v948
          %v982 = vunpack.c.h.b16 %v948
          %v983 = vunpack.c.l.b16 %v949
          %v984 = vunpack.c.h.b16 %v949
          %v985 = vunpack.c.l.b16 %v950
          %v986 = vunpack.c.h.b16 %v950
          %v987 = vunpack.c.l.b16 %v951
          %v988 = vunpack.c.h.b16 %v951
          %v989 = vunpack.c.l.b16 %v952
          %v990 = vunpack.c.h.b16 %v952
          %v991 = vunpack.c.l.b16 %v953
          %v992 = vunpack.c.h.b16 %v953
          %v993 = vunpack.c.l.b16 %v954
          %v994 = vunpack.c.h.b16 %v954
          %v995 = vunpack.c.l.b16 %v955
          %v996 = vunpack.c.h.b16 %v955
          %v997 = vunpack.c.l.b16 %v956
          %v998 = vunpack.c.h.b16 %v956
          %v999 = vunpack.c.l.b16 %v957
          %v1000 = vunpack.c.h.b16 %v957
          %v1001 = vunpack.c.l.b16 %v958
          %v1002 = vunpack.c.h.b16 %v958
          %v1003 = vunpack.c.l.b16 %v959
          %v1004 = vunpack.c.h.b16 %v959
          %v1005 = vunpack.c.l.b16 %v960
          %v1006 = vunpack.c.h.b16 %v960
          %v1007 = vunpack.c.l.b16 %v961
          %v1008 = vunpack.c.h.b16 %v961
          %v1009 = vunpack.c.l.b16 %v962
          %v1010 = vunpack.c.h.b16 %v962
          %v1011 = vpack.c.b16 %v979, %v979
          %v1012 = vpack.c.b16 %v980, %v980
          %v1013 = vpack.c.b16 %v981, %v981
          %v1014 = vpack.c.b16 %v982, %v982
          %v1015 = vpack.c.b16 %v983, %v983
          %v1016 = vpack.c.b16 %v984, %v984
          %v1017 = vpack.c.b16 %v985, %v985
          %v1018 = vpack.c.b16 %v986, %v986
          %v1019 = vpack.c.b16 %v987, %v987
          %v1020 = vpack.c.b16 %v988, %v988
          %v1021 = vpack.c.b16 %v989, %v989
          %v1022 = vpack.c.b16 %v990, %v990
          %v1023 = vpack.c.b16 %v991, %v991
          %v1024 = vpack.c.b16 %v992, %v992
          %v1025 = vpack.c.b16 %v993, %v993
          %v1026 = vpack.c.b16 %v994, %v994
          %v1027 = vpack.c.b16 %v995, %v995
          %v1028 = vpack.c.b16 %v996, %v996
          %v1029 = vpack.c.b16 %v997, %v997
          %v1030 = vpack.c.b16 %v998, %v998
          %v1031 = vpack.c.b16 %v999, %v999
          %v1032 = vpack.c.b16 %v1000, %v1000
          %v1033 = vpack.c.b16 %v1001, %v1001
          %v1034 = vpack.c.b16 %v1002, %v1002
          %v1035 = vpack.c.b16 %v1003, %v1003
          %v1036 = vpack.c.b16 %v1004, %v1004
          %v1037 = vpack.c.b16 %v1005, %v1005
          %v1038 = vpack.c.b16 %v1006, %v1006
          %v1039 = vpack.c.b16 %v1007, %v1007
          %v1040 = vpack.c.b16 %v1008, %v1008
          %v1041 = vpack.c.b16 %v1009, %v1009
          %v1042 = vpack.c.b16 %v1010, %v1010
          %1075 = vst [vmem:[%s233] sm:$0xf] %v1011
          %1076 = vst [vmem:[%s233 + $0x4] sm:$0xf] %v1012
          %1077 = vst [vmem:[%s233 + $0x8] sm:$0xf] %v1013
          %1078 = vst [vmem:[%s233 + $0xc] sm:$0xf] %v1014
          %1079 = vst [vmem:[%s233 + $0x10] sm:$0xf] %v1015
          %1080 = vst [vmem:[%s233 + $0x14] sm:$0xf] %v1016
          %1081 = vst [vmem:[%s233 + $0x18] sm:$0xf] %v1017
          %1082 = vst [vmem:[%s233 + $0x1c] sm:$0xf] %v1018
          %1083 = vst [vmem:[%s233 + $0x20] sm:$0xf] %v1019
          %1084 = vst [vmem:[%s233 + $0x24] sm:$0xf] %v1020
          %1085 = vst [vmem:[%s233 + $0x28] sm:$0xf] %v1021
          %1086 = vst [vmem:[%s233 + $0x2c] sm:$0xf] %v1022
          %1087 = vst [vmem:[%s233 + $0x30] sm:$0xf] %v1023
          %1088 = vst [vmem:[%s233 + $0x34] sm:$0xf] %v1024
          %1089 = vst [vmem:[%s233 + $0x38] sm:$0xf] %v1025
          %1090 = vst [vmem:[%s233 + $0x3c] sm:$0xf] %v1026
          %1091 = vst [vmem:[%s233 + $0x40] sm:$0xf] %v1027
          %1092 = vst [vmem:[%s233 + $0x44] sm:$0xf] %v1028
          %1093 = vst [vmem:[%s233 + $0x48] sm:$0xf] %v1029
          %1094 = vst [vmem:[%s233 + $0x4c] sm:$0xf] %v1030
          %1095 = vst [vmem:[%s233 + $0x50] sm:$0xf] %v1031
          %1096 = vst [vmem:[%s233 + $0x54] sm:$0xf] %v1032
          %1097 = vst [vmem:[%s233 + $0x58] sm:$0xf] %v1033
          %1098 = vst [vmem:[%s233 + $0x5c] sm:$0xf] %v1034
          %1099 = vst [vmem:[%s233 + $0x60] sm:$0xf] %v1035
          %1100 = vst [vmem:[%s233 + $0x64] sm:$0xf] %v1036
          %1101 = vst [vmem:[%s233 + $0x68] sm:$0xf] %v1037
          %1102 = vst [vmem:[%s233 + $0x6c] sm:$0xf] %v1038
          %1103 = vst [vmem:[%s233 + $0x70] sm:$0xf] %v1039
          %1104 = vst [vmem:[%s233 + $0x74] sm:$0xf] %v1040
          %1105 = vst [vmem:[%s233 + $0x78] sm:$0xf] %v1041
          %1106 = vst [vmem:[%s233 + $0x7c] sm:$0xf] %v1042
        $region40: #{_conv2d_impl.1} parent=31 // pred_fallthru
          _
        %s1107 = sand.u32 %s128, 1
        %s1108 = scalar_lea.sflag [#allocation4], %s1107
        %s1109 = sand.u32 %s128, 1
        %s1110 = smul.addr %s1109, 128
        %s1111 = scalar_lea.vmem [#allocation3], %s1110
        // Predicated region
        $region41: #{_conv2d_impl.1} parent=31 // pred_check
          %p1112 = pneg %p138
        $region42: #{_conv2d_impl.1} parent=31 // pred_check_branch
          %1114 = sbr.rel (%p1112) target = $region44
        $region43: #{_conv2d_impl.1} parent=31 // pred_region
          %s1115 = smul.u32 32, %s22
          %s1117 = ssub.s32 2048, 2048
          %1118 = vsyncadd %s1108, %s1117
          %s1119 = sadd.s32 %s23, %s1115
          %s1120 = smul.addr %s1119, 64
          %s1121 = scalar_lea.hbm %s3, %s1120
          %s1122 = sshll.u32 %s1111, 4
          %s1123 = int_to_ptr.vmem [resolvable:$true] %s1122
          %1128 = dma.vmem_to_hbm [thread:$0]  %s1123, 2048, %s1121, %s1108, 64, 64, 4
        $region44: #{_conv2d_impl.1} parent=31 // pred_fallthru
          _
      $region32: #{_conv2d_impl.1} parent=5 // pred_fallthru
        _
      %p1129 = scmp.le.s32.totalorder 2, %s12
      // Predicated region
      $region45: #{_conv2d_impl.1} parent=5 // pred_check
        %p1130 = pneg %p1129
      $region46: #{_conv2d_impl.1} parent=5 // pred_check_branch
        %1132 = sbr.rel (%p1130) target = $region48
      $region47: #{_conv2d_impl.1} parent=5 // pred_region
        %s1133 = ssub.s32 %s12, 2
        // Predicated region
        $region49: #{_conv2d_impl.1} parent=47 // pred_check
          %p1134 = pneg %p144
        $region50: #{_conv2d_impl.1} parent=47 // pred_check_branch
          %1136 = sbr.rel (%p1134) target = $region52
        $region51: #{_conv2d_impl.1} parent=47 // pred_region
          %s1137 = sand.u32 %s129, 1
          %s1138 = scalar_lea.sflag [#allocation4], %s1137
          %s1139 = sand.u32 %s129, 1
          %s1140 = smul.addr %s1139, 128
          %s1141 = scalar_lea.vmem [#allocation3], %s1140
          %1142 = dma.done %s1138, 2048
        $region52: #{_conv2d_impl.1} parent=47 // pred_fallthru
          _
      $region48: #{_conv2d_impl.1} parent=5 // pred_fallthru
        _
    $region6: #{_conv2d_impl.1} parent=1 // loop_footer
      %s16 = sadd.s32 1, %s12
    $region7: #{_conv2d_impl.1} parent=1 // loop_footer_branch
      %11 = sbr.rel target = $region3
    $region8: #{_conv2d_impl.1} parent=1 // loop_exit
      _
    %1143 = vsyncpa [#allocation4], 1
    %s1144 = scalar_lea.sflag [#allocation4], 1
    %1145 = vsyncpa %s1144, 1

</llo_original>
